<compile_context>
chip_gen: v6e
topology: v6e:2x2x1
jax: 0.10.0
libtpu: 0.0.40
codegen_flags: <defaults>
</compile_context>

<pallas_src>
import functools
import math

import jax
import jax.numpy as jnp
from jax.experimental import pallas as pl
from jax.experimental.pallas import tpu as pltpu


def _gaussian_block_kernel(x_ref, w_ref, b_ref, out_ref, *, half):
    """One fused MXU push: y = x @ W_cat + b_cat.

    Column layout of the fused slab (lane axis):
      [0,     half)  -> mu heads   (K*OUT cols + zero pad up to `half`)
      [half, 2*half) -> log_var heads (K*OUT cols + zero pad); softplus here.
    `half` is a multiple of 128, so both stores below are lane-aligned/dense.
    """
    y = (jnp.dot(x_ref[...], w_ref[...], preferred_element_type=jnp.float32)
         + b_ref[...])

    # mu half: straight copy.
    out_ref[:, :half] = y[:, :half].astype(out_ref.dtype)

    # log_var half: PyTorch F.softplus (linear pass-through for z > 20).
    z = y[:, half:]
    sp = jnp.where(z > 20.0, z, jnp.log1p(jnp.exp(jnp.minimum(z, 20.0))))
    out_ref[:, half:] = sp.astype(out_ref.dtype)


def prepare_params(w_mu, b_mu, w_lv, b_lv):
    """One-time fusion of per-head Linear params into a single [IN, Wpad] slab.

    Column k*OUT + o  <-  w[k, :, o].  mu occupies [0, K*OUT), zero-padded to a
    multiple of 128; log_var occupies [half, half + K*OUT), zero-padded likewise.
    Call once at parameter-init time and reuse the result every forward.
    """
    K, IN, OUT = w_mu.shape
    KO = K * OUT
    half = ((KO + 127) // 128) * 128

    def pack(w, b):
        w_f = jnp.transpose(w, (1, 0, 2)).reshape(IN, KO)
        b_f = b.reshape(1, KO)
        w_f = jnp.pad(w_f, ((0, 0), (0, half - KO)))
        b_f = jnp.pad(b_f, ((0, 0), (0, half - KO)))
        return w_f, b_f

    w_mu_f, b_mu_f = pack(w_mu, b_mu)
    w_lv_f, b_lv_f = pack(w_lv, b_lv)
    w_cat = jnp.concatenate([w_mu_f, w_lv_f], axis=1)
    b_cat = jnp.concatenate([b_mu_f, b_lv_f], axis=1)
    return w_cat, b_cat


@functools.partial(jax.jit, static_argnames=("n_kernels", "out_features"))
def gaussian_block(x, w_cat, b_cat, *, n_kernels, out_features):
    """Forward pass of GaussianBlock.

    Args:
      x:     [B, IN] float32
      w_cat: [IN, Wpad] fused weight slab from prepare_params()
      b_cat: [1, Wpad]  fused bias slab from prepare_params()
    Returns:
      (x, mu, log_var) with mu, log_var of shape [n_kernels, B, out_features].
    """
    B, _ = x.shape
    Wpad = w_cat.shape[1]
    half = Wpad // 2
    KO = n_kernels * out_features

    kernel = functools.partial(_gaussian_block_kernel, half=half)

    # Single-shot (no grid): the whole ~30 KiB working set lives in VMEM with
    # no pipeline double-buffering or per-step bookkeeping.
    y = pl.pallas_call(
        kernel,
        out_shape=jax.ShapeDtypeStruct((B, Wpad), x.dtype),
        in_specs=[
            pl.BlockSpec(memory_space=pltpu.MemorySpace.VMEM),  # x
            pl.BlockSpec(memory_space=pltpu.MemorySpace.VMEM),  # fused weights
            pl.BlockSpec(memory_space=pltpu.MemorySpace.VMEM),  # fused biases
        ],
        out_specs=pl.BlockSpec(memory_space=pltpu.MemorySpace.VMEM),
    )(x, w_cat, b_cat)

    # Reinterpret the lane-dense slab as (K, B, OUT); fused by XLA under jit.
    mu = jnp.transpose(y[:, :KO].reshape(B, n_kernels, out_features), (1, 0, 2))
    log_var = jnp.transpose(
        y[:, half:half + KO].reshape(B, n_kernels, out_features), (1, 0, 2))
    return x, mu, log_var


def init_params(key, n_kernels, in_features, out_features):
    """Deterministic xavier_uniform weights, zero biases (matches random_init)."""
    bound = math.sqrt(6.0 / (in_features + out_features))
    k_mu, k_lv = jax.random.split(key)
    w_mu = jax.random.uniform(
        k_mu, (n_kernels, in_features, out_features),
        minval=-bound, maxval=bound, dtype=jnp.float32)
    w_lv = jax.random.uniform(
        k_lv, (n_kernels, in_features, out_features),
        minval=-bound, maxval=bound, dtype=jnp.float32)
    b_mu = jnp.zeros((n_kernels, 1, out_features), jnp.float32)
    b_lv = jnp.zeros((n_kernels, 1, out_features), jnp.float32)
    return w_mu, b_mu, w_lv, b_lv


if __name__ == "__main__":
    key = jax.random.PRNGKey(0)
    n_kernels = 3
    batch = 8
    in_features = 32
    out_features = 32

    kx, kp = jax.random.split(key)
    x = jax.random.normal(kx, (batch, in_features), dtype=jnp.float32)
    w_mu, b_mu, w_lv, b_lv = init_params(kp, n_kernels, in_features, out_features)

    # One-time parameter fusion (hoisted out of the forward path).
    w_cat, b_cat = prepare_params(w_mu, b_mu, w_lv, b_lv)
    w_cat, b_cat = jax.block_until_ready((w_cat, b_cat))

    x_out, mu, log_var = gaussian_block(
        x, w_cat, b_cat, n_kernels=n_kernels, out_features=out_features)
    jax.block_until_ready((x_out, mu, log_var))

    # Reference check in plain JAX (same semantics as the PyTorch forward).
    mu_ref = jnp.stack([x @ w_mu[i] + b_mu[i, 0] for i in range(n_kernels)])
    z_ref = jnp.stack([x @ w_lv[i] + b_lv[i, 0] for i in range(n_kernels)])
    lv_ref = jnp.where(z_ref > 20.0, z_ref,
                       jnp.log1p(jnp.exp(jnp.minimum(z_ref, 20.0))))
    assert jnp.allclose(mu, mu_ref, atol=1e-5, rtol=1e-5)
    assert jnp.allclose(log_var, lv_ref, atol=1e-5, rtol=1e-5)
    assert jnp.array_equal(x_out, x)

    print("KERNEL_OK")
</pallas_src>

<mosaic_0001>
module attributes {stable_mosaic.version = 11 : i64} {
  func.func @_gaussian_block_kernel(%arg0: memref<8x32xf32, #tpu.memory_space<vmem>>, %arg1: memref<32x256xf32, #tpu.memory_space<vmem>>, %arg2: memref<1x256xf32, #tpu.memory_space<vmem>>, %arg3: memref<8x256xf32, #tpu.memory_space<vmem>>) attributes {dimension_semantics = [], scalar_prefetch = 0 : i64, scratch_operands = 0 : i64, tpu.core_type = #tpu.core_type<tc>} {
    %c0 = arith.constant 0 : index
    %c0_0 = arith.constant 0 : index
    %0 = vector.load %arg0[%c0, %c0_0] : memref<8x32xf32, #tpu.memory_space<vmem>>, vector<8x32xf32>
    %c0_1 = arith.constant 0 : index
    %c0_2 = arith.constant 0 : index
    %1 = vector.load %arg1[%c0_1, %c0_2] : memref<32x256xf32, #tpu.memory_space<vmem>>, vector<32x256xf32>
    %cst = arith.constant dense<0.000000e+00> : vector<8x256xf32>
    %2 = tpu.matmul %0, %1, %cst {dimension_numbers = #tpu.dot_dimension_numbers<[1], [0], [0], [1], [0, 0, 1, 1], [], []>} : vector<8x32xf32>, vector<32x256xf32>, vector<8x256xf32> -> vector<8x256xf32>
    %c0_3 = arith.constant 0 : index
    %c0_4 = arith.constant 0 : index
    %3 = vector.load %arg2[%c0_3, %c0_4] : memref<1x256xf32, #tpu.memory_space<vmem>>, vector<1x256xf32>
    %4 = vector.broadcast %3 : vector<1x256xf32> to vector<8x256xf32>
    %5 = arith.addf %2, %4 : vector<8x256xf32>
    %6 = vector.extract_strided_slice %5 {offsets = [0, 0], sizes = [8, 128], strides = [1, 1]} : vector<8x256xf32> to vector<8x128xf32>
    %c0_5 = arith.constant 0 : index
    %c0_6 = arith.constant 0 : index
    %7 = vector.load %arg3[%c0_5, %c0_6] : memref<8x256xf32, #tpu.memory_space<vmem>>, vector<8x128xf32>
    tpu.vector_store %arg3[%c0_5, %c0_6], %6 {strides = array<i32>} : memref<8x256xf32, #tpu.memory_space<vmem>>, vector<8x128xf32>,
    %8 = vector.extract_strided_slice %5 {offsets = [0, 128], sizes = [8, 128], strides = [1, 1]} : vector<8x256xf32> to vector<8x128xf32>
    %cst_7 = arith.constant 2.000000e+01 : f32
    %9 = vector.broadcast %cst_7 : f32 to vector<8x128xf32>
    %10 = arith.cmpf ogt, %8, %9 : vector<8x128xf32>
    %cst_8 = arith.constant 2.000000e+01 : f32
    %11 = vector.broadcast %cst_8 : f32 to vector<8x128xf32>
    %12 = arith.minimumf %8, %11 : vector<8x128xf32>
    %13 = math.exp %12 : vector<8x128xf32>
    %14 = math.log1p %13 : vector<8x128xf32>
    %15 = arith.select %10, %8, %14 : vector<8x128xi1>, vector<8x128xf32>
    %c0_9 = arith.constant 0 : index
    %c128 = arith.constant 128 : index
    %16 = vector.load %arg3[%c0_9, %c128] : memref<8x256xf32, #tpu.memory_space<vmem>>, vector<8x128xf32>
    tpu.vector_store %arg3[%c0_9, %c128], %15 {strides = array<i32>} : memref<8x256xf32, #tpu.memory_space<vmem>>, vector<8x128xf32>,
    return
  }
}

</mosaic_0001>

<llo_original>
// kernel: gaussian_block.1
$region0: #{gaussian_block.1}
  #allocation0 [shape = 'u32[]', space=smem, size = 0x4, offset = 0x4, fixed_abs, tag = 'smem constant byte address 0x4 - core index']
  #allocation1 [shape = 'u32[144,128]{1,0:T(1,128)}', space=vmem, size = 0x12000, scoped, tag = 'internal scratch']
  %s0 = inlined_call_operand.hbm [shape: f32[8,32], index: 0, kind: input, shape index: {}]
  %s1 = inlined_call_operand.hbm [shape: f32[32,256], index: 1, kind: input, shape index: {}]
  %s2 = inlined_call_operand.vmem [shape: f32[1,256], index: 2, kind: input, shape index: {}]
  %s3 = inlined_call_operand.vmem [shape: f32[8,256], index: 3, kind: output, shape index: {}]
  %s4 = sld [smem:[#allocation0]]
  $region30: #{gaussian_block.1} parent=0
    _
  %s6 = ssub.s32 1, %s4
  %s7 = scalar_select 0, %s6, %s4
  $region1: #{gaussian_block.1} parent=0
    #allocation2 [shape = 'u8[4096]{0}', space=vmem, size = 0x1000, scoped, tag = 'input window, operand 0, single buffered']
    #allocation3 [shape = 's32[1]{0}', space=sflag, size = 0x4, scoped, tag = 'scoped memory for gaussian_block.1']
    #allocation4 [shape = 'u8[32768]{0}', space=vmem, size = 0x8000, scoped, tag = 'input window, operand 1, single buffered']
    #allocation5 [shape = 's32[1]{0}', space=sflag, size = 0x4, scoped, tag = 'scoped memory for gaussian_block.1']
    %8 = vsyncpa [#allocation3], 0
    %9 = vsyncpa [#allocation5], 0
    // Predicated region
    $region2: #{gaussian_block.1} parent=1 // pred_check
      _
    $region3: #{gaussian_block.1} parent=1 // pred_check_branch
      %11 = sbr.rel (0) target = $region5
    $region4: #{gaussian_block.1} parent=1 // pred_region
      %s13 = ssub.s32 128, 128
      %14 = vsyncadd [#allocation3], %s13
      %s16 = sshll.u32 [#allocation2], 4
      %s17 = int_to_ptr.vmem [resolvable:$true] %s16
      %19 = dma.hbm_to_vmem [thread:$0]  %s0, 128, %s17, [#allocation3]
    $region5: #{gaussian_block.1} parent=1 // pred_fallthru
      _
    // Predicated region
    $region6: #{gaussian_block.1} parent=1 // pred_check
      _
    $region7: #{gaussian_block.1} parent=1 // pred_check_branch
      %21 = sbr.rel (0) target = $region9
    $region8: #{gaussian_block.1} parent=1 // pred_region
      %s23 = ssub.s32 1024, 1024
      %24 = vsyncadd [#allocation5], %s23
      %s25 = sshll.u32 [#allocation4], 4
      %s26 = int_to_ptr.vmem [resolvable:$true] %s25
      %31 = dma.hbm_to_vmem [thread:$0]  %s1, 1024, %s26, [#allocation5], 256, 256, 16
    $region9: #{gaussian_block.1} parent=1 // pred_fallthru
      _
    // Predicated region
    $region10: #{gaussian_block.1} parent=1 // pred_check
      _
    $region11: #{gaussian_block.1} parent=1 // pred_check_branch
      %33 = sbr.rel (0) target = $region13
    $region12: #{gaussian_block.1} parent=1 // pred_region
      _
    $region13: #{gaussian_block.1} parent=1 // pred_fallthru
      _
    // Predicated region
    $region14: #{gaussian_block.1} parent=1 // pred_check
      _
    $region15: #{gaussian_block.1} parent=1 // pred_check_branch
      %35 = sbr.rel (0) target = $region17
    $region16: #{gaussian_block.1} parent=1 // pred_region
      %36 = dma.done [#allocation3], 128
    $region17: #{gaussian_block.1} parent=1 // pred_fallthru
      _
    // Predicated region
    $region18: #{gaussian_block.1} parent=1 // pred_check
      _
    $region19: #{gaussian_block.1} parent=1 // pred_check_branch
      %38 = sbr.rel (0) target = $region21
    $region20: #{gaussian_block.1} parent=1 // pred_region
      %39 = dma.done [#allocation5], 1024
    $region21: #{gaussian_block.1} parent=1 // pred_fallthru
      _
    %v40 = vld [vmem:[#allocation2] sm:$0xff]
    %v41 = vld [vmem:[#allocation4] sm:$0xff]
    %v42 = vld [vmem:[#allocation4 + $0x8] sm:$0xff]
    %v43 = vld [vmem:[#allocation4 + $0x10] sm:$0xff]
    %v44 = vld [vmem:[#allocation4 + $0x18] sm:$0xff]
    %v45 = vld [vmem:[#allocation4 + $0x20] sm:$0xff]
    %v46 = vld [vmem:[#allocation4 + $0x28] sm:$0xff]
    %v47 = vld [vmem:[#allocation4 + $0x30] sm:$0xff]
    %v48 = vld [vmem:[#allocation4 + $0x38] sm:$0xff]
    %v49 = vld [vmem:[%s2] sm:$0x3]
    %v51 = vlaneseq
    %v52 = vshrl.u32 %v51, 7
    %v53 = vsub.s32 0, %v52
    %v54 = vrot.slane %v49, %v53
    %v55 = vlaneseq
    %v56 = vshrl.u32 %v55, 7
    %v57 = vsub.s32 1, %v56
    %v58 = vrot.slane %v49, %v57
    %vm61 = vcmask 261120
    %v63 = vsel %vm61, %v40, 0
    %65 = vmatprep.subr.mxu0 0.0
    %66 = vmatpush1.msra.mxu0 0.0
    %67 = vmatprep.subr.mxu0 0.0
    %68 = vmatpush1.msra.mxu0 0.0
    %69 = vmatprep.subr.mxu0 0.0
    %70 = vmatpush1.msra.mxu0 0.0
    %71 = vmatprep.subr.mxu0 0.0
    %72 = vmatpush1.msra.mxu0 0.0
    %73 = vmatprep.subr.mxu0 0.0
    %74 = vmatpush1.msra.mxu0 0.0
    %75 = vmatprep.subr.mxu0 0.0
    %76 = vmatpush1.msra.mxu0 0.0
    %77 = vmatprep.subr.mxu0 0.0
    %78 = vmatpush1.msra.mxu0 0.0
    %79 = vmatprep.subr.mxu0 0.0
    %80 = vmatpush1.msra.mxu0 0.0
    %81 = vmatprep.subr.mxu0 0.0
    %82 = vmatpush1.msra.mxu0 0.0
    %83 = vmatprep.subr.mxu0 0.0
    %84 = vmatpush1.msra.mxu0 0.0
    %85 = vmatprep.subr.mxu0 0.0
    %86 = vmatpush1.msra.mxu0 0.0
    %87 = vmatprep.subr.mxu0 0.0
    %88 = vmatpush1.msra.mxu0 0.0
    %89 = vmatprep.subr.mxu0 %v48
    %90 = vmatpush1.msra.mxu0 %v47
    %91 = vmatprep.subr.mxu0 %v46
    %92 = vmatpush1.msra.mxu0 %v45
    %93 = vmatprep.subr.mxu0 %v44
    %94 = vmatpush1.msra.mxu0 %v43
    %95 = vmatprep.subr.mxu0 %v42
    %96 = vmatpush1.msra.mxu0 %v41
    %97 = vmatprep.subr.mxu0 0.0
    %98 = vmatpush2.msra.mxu0 0.0
    %99 = vmatprep.subr.mxu0 0.0
    %100 = vmatpush2.msra.mxu0 0.0
    %101 = vmatprep.subr.mxu0 0.0
    %102 = vmatpush2.msra.mxu0 0.0
    %103 = vmatprep.subr.mxu0 0.0
    %104 = vmatpush2.msra.mxu0 0.0
    %105 = vmatprep.subr.mxu0 0.0
    %106 = vmatpush2.msra.mxu0 0.0
    %107 = vmatprep.subr.mxu0 0.0
    %108 = vmatpush2.msra.mxu0 0.0
    %109 = vmatprep.subr.mxu0 0.0
    %110 = vmatpush2.msra.mxu0 0.0
    %111 = vmatprep.subr.mxu0 0.0
    %112 = vmatpush2.msra.mxu0 0.0
    %113 = vmatprep.subr.mxu0 0.0
    %114 = vmatpush2.msra.mxu0 0.0
    %115 = vmatprep.subr.mxu0 0.0
    %116 = vmatpush2.msra.mxu0 0.0
    %117 = vmatprep.subr.mxu0 0.0
    %118 = vmatpush2.msra.mxu0 0.0
    %119 = vmatprep.subr.mxu0 0.0
    %120 = vmatpush2.msra.mxu0 0.0
    %121 = vmatprep.subr.mxu0 0.0
    %122 = vmatpush2.msra.mxu0 0.0
    %123 = vmatprep.subr.mxu0 0.0
    %124 = vmatpush2.msra.mxu0 0.0
    %125 = vmatprep.subr.mxu0 0.0
    %126 = vmatpush2.msra.mxu0 0.0
    %127 = vmatprep.subr.mxu0 0.0
    %128 = vmatpush2.msra.mxu0 0.0
    %129 = vmatprep.mubr.f32.mxu0 0.0
    %130 = vmatmul.mubr.f32.gmra.mxu0 %v63
    %v131 = vpop.f32.mrf.mxu0
    %v132 = vadd.f32 %v54, %v131
    %v133 = vpop.f32.mrf.mxu0
    %v134 = vadd.f32 %v58, %v133
    %135 = vdwg.mxu0
    %136 = vst [vmem:[%s3] sm:$0xff] %v132
    %vm137 = vcmp.gt.f32.partialorder %v134, 20.0
    %v138 = vmin.f32 %v134, 20.0
    %v139 = vmul.f32 %v138, 1.442695
    %v140 = vpow.pop %v139
    %v141 = vadd.f32 %v140, 1.0
    %v142 = vlog2.pop %v141
    %v143 = vmul.f32 %v142, 0.6931472
    %v144 = vmul.f32 -0.5, %v140
    %v145 = vadd.f32 %v144, 1.0
    %v146 = vmul.f32 %v145, %v140
    %v147 = vand.u32 2147483647, %v140
    %vm148 = vcmp.lt.f32.partialorder %v147, 0.0004427343
    %v149 = vsel %vm148, %v146, %v143
    %v150 = vsel %vm137, %v134, %v149
    %151 = vst [vmem:[%s3 + $0x8] sm:$0xff] %v150
    // Predicated region
    $region22: #{gaussian_block.1} parent=1 // pred_check
      _
    $region23: #{gaussian_block.1} parent=1 // pred_check_branch
      %153 = sbr.rel (0) target = $region25
    $region24: #{gaussian_block.1} parent=1 // pred_region
      _
    $region25: #{gaussian_block.1} parent=1 // pred_fallthru
      _
    // Predicated region
    $region26: #{gaussian_block.1} parent=1 // pred_check
      _
    $region27: #{gaussian_block.1} parent=1 // pred_check_branch
      %155 = sbr.rel (0) target = $region29
    $region28: #{gaussian_block.1} parent=1 // pred_region
      _
    $region29: #{gaussian_block.1} parent=1 // pred_fallthru
      _
    %156 = vsyncpa [#allocation3], 1
    %157 = vsyncpa [#allocation5], 1

</llo_original>
